<compile_context>
chip_gen: v6e
topology: v6e:2x2x1
jax: 0.10.0
libtpu: 0.0.40
codegen_flags: <defaults>
</compile_context>

<pallas_src>
import jax
import jax.numpy as jnp
import numpy as np
from jax.experimental import pallas as pl
from jax.experimental.pallas import tpu as pltpu

_LW = 128          # lane width: packed hidden width (C*H padded to 128)
_NEG_INF = -1e30   # softmax mask for padded attention lanes


# --------------------------- one-time host packing ----------------------------
def _build_layout(in_f, lw):
    """Row offsets of each section inside the (n_rows, lw) weight slab."""
    offs, r = {}, 0

    def take(name, rows):
        nonlocal r
        offs[name] = r
        r += -(-rows // 8) * 8  # round each section up to 8 rows (sublane tile)

    take("a1", in_f)    # attention layer-1 weights      (in_f, lw)
    take("w1", in_f)    # packed component layer-1        (in_f, lw)
    take("bias", 4)     # +0 ab1, +1 ab2(-inf masked), +2 b1cat, +3 b2cat
    take("a2", lw)      # attention layer-2 (padded)      (lw, lw)
    take("w2", lw)      # block-diagonal component layer-2
    take("w3", lw)      # component layer-3 (cols 0:out_f)
    take("e", lw)       # attn -> per-lane gate expansion
    take("b3", lw)      # attn -> weighted layer-3 bias
    return offs, r


def _pack_params(params, lw=_LW):
    """One-time numpy packing of all module weights into a single (N, lw) slab."""
    a1 = np.asarray(params["a1"], np.float32)              # (in_f, H)
    ab1 = np.asarray(params["ab1"], np.float32).reshape(-1)
    a2 = np.asarray(params["a2"], np.float32)               # (H, C)
    ab2 = np.asarray(params["ab2"], np.float32).reshape(-1)
    w1 = np.asarray(params["w1"], np.float32)                # (C, in_f, H)
    b1 = np.asarray(params["b1"], np.float32)                # (C, 1, H)
    w2 = np.asarray(params["w2"], np.float32)                # (C, H, H)
    b2 = np.asarray(params["b2"], np.float32)                # (C, 1, H)
    w3 = np.asarray(params["w3"], np.float32)                # (C, H, out_f)
    b3 = np.asarray(params["b3"], np.float32)                # (C, 1, out_f)

    C, in_f, H = w1.shape
    out_f = w3.shape[-1]
    ch = C * H
    assert H <= lw and ch <= lw and out_f <= lw and C <= lw, (
        "lane-dense packing requires C*H, H, out_f <= 128")

    offs, n_rows = _build_layout(in_f, lw)
    slab = np.zeros((n_rows, lw), np.float32)

    # attention net
    slab[offs["a1"]:offs["a1"] + in_f, :H] = a1
    slab[offs["bias"] + 0, :H] = ab1
    slab[offs["a2"]:offs["a2"] + H, :C] = a2
    slab[offs["bias"] + 1, :] = _NEG_INF          # kill padded softmax lanes
    slab[offs["bias"] + 1, :C] = ab2

    # packed component MLPs
    slab[offs["w1"]:offs["w1"] + in_f, :ch] = np.transpose(w1, (1, 0, 2)).reshape(in_f, ch)
    slab[offs["bias"] + 2, :ch] = b1.reshape(ch)
    for c in range(C):                             # block-diagonal second layer
        slab[offs["w2"] + c * H:offs["w2"] + (c + 1) * H, c * H:(c + 1) * H] = w2[c]
    slab[offs["bias"] + 3, :ch] = b2.reshape(ch)
    slab[offs["w3"]:offs["w3"] + ch, :out_f] = w3.reshape(ch, out_f)

    # attention expansion E (row c -> ones over component c's H lanes) and b3
    for c in range(C):
        slab[offs["e"] + c, c * H:(c + 1) * H] = 1.0
    slab[offs["b3"]:offs["b3"] + C, :out_f] = b3.reshape(C, out_f)

    cfg = dict(in_f=in_f, out_f=out_f, lw=lw, n_rows=n_rows, offs=offs)
    return slab, cfg


# ------------------------------- fused kernel ---------------------------------
def _make_kernel(cfg):
    in_f, lw, o = cfg["in_f"], cfg["lw"], cfg["offs"]

    def kernel(x_ref, w_ref, o_ref):
        f32 = jnp.float32
        x = x_ref[...]                                           # (TB, in_f)

        a1 = w_ref[o["a1"]:o["a1"] + in_f, :]                    # (in_f, lw)
        w1 = w_ref[o["w1"]:o["w1"] + in_f, :]                    # (in_f, lw)
        ab1 = w_ref[o["bias"] + 0:o["bias"] + 1, :]              # (1, lw)
        ab2 = w_ref[o["bias"] + 1:o["bias"] + 2, :]
        b1 = w_ref[o["bias"] + 2:o["bias"] + 3, :]
        b2 = w_ref[o["bias"] + 3:o["bias"] + 4, :]
        a2 = w_ref[o["a2"]:o["a2"] + lw, :]                      # (lw, lw)
        w2 = w_ref[o["w2"]:o["w2"] + lw, :]
        w3 = w_ref[o["w3"]:o["w3"] + lw, :]
        e = w_ref[o["e"]:o["e"] + lw, :]
        b3 = w_ref[o["b3"]:o["b3"] + lw, :]

        # ---- attention net: Linear -> ReLU -> Linear -> softmax --------------
        ha = jnp.maximum(jnp.dot(x, a1, preferred_element_type=f32) + ab1, 0.0)
        logits = jnp.dot(ha, a2, preferred_element_type=f32) + ab2  # pads ~ -1e30
        m = jnp.max(logits, axis=-1, keepdims=True)
        ez = jnp.exp(logits - m)
        inv = pl.reciprocal(jnp.sum(ez, axis=-1, keepdims=True), approx=True)
        attn = ez * inv                                          # (TB, lw), pads 0

        # ---- packed component MLPs: Linear -> ReLU -> Linear -> ReLU ---------
        h1 = jnp.maximum(jnp.dot(x, w1, preferred_element_type=f32) + b1, 0.0)
        h2 = jnp.maximum(jnp.dot(h1, w2, preferred_element_type=f32) + b2, 0.0)

        # ---- attention-weighted mixture folded into the last matmul ----------
        gate = jnp.dot(attn, e, preferred_element_type=f32)      # (TB, lw)
        y = jnp.dot(h2 * gate, w3, preferred_element_type=f32)
        y = y + jnp.dot(attn, b3, preferred_element_type=f32)    # (TB, lw), lane-dense
        o_ref[...] = y.astype(o_ref.dtype)

    return kernel


# --------------------------------- wrapper -------------------------------------
def _choose_batch_tile(B):
    for tb in (512, 256, 128, 64, 32, 16, 8):
        if B % tb == 0:
            return tb
    return B


def make_mixture_forward(params):
    """One-time packing; returns a jitted forward(x) -> (B, out_features)."""
    slab_np, cfg = _pack_params(params)
    slab = jnp.asarray(slab_np)
    kernel = _make_kernel(cfg)
    in_f, out_f, lw, n_rows = cfg["in_f"], cfg["out_f"], cfg["lw"], cfg["n_rows"]

    @jax.jit
    def forward(x, slab):
        B = x.shape[0]
        tb = _choose_batch_tile(B)
        grid = (B // tb,)
        flops = 2 * B * (2 * in_f * lw + 5 * lw * lw)
        bytes_accessed = x.size * 4 + slab.size * 4 + B * lw * 4

        y = pl.pallas_call(
            kernel,
            out_shape=jax.ShapeDtypeStruct((B, lw), jnp.float32),
            grid=grid,
            in_specs=[
                pl.BlockSpec((tb, in_f), lambda i: (i, 0)),     # x tile
                pl.BlockSpec((n_rows, lw), lambda i: (0, 0)),   # weight slab (resident)
            ],
            out_specs=pl.BlockSpec((tb, lw), lambda i: (i, 0)),
            compiler_params=pltpu.CompilerParams(
                dimension_semantics=("parallel",)),
            cost_estimate=pl.CostEstimate(
                flops=flops, transcendentals=B * lw,
                bytes_accessed=bytes_accessed),
        )(x, slab)
        return y[:, :out_f]   # free layout plumbing: drop the zero pad lanes

    return lambda x: forward(x, slab)


# ------------------------------ pure-JAX reference -----------------------------
def _reference_forward(x, params):
    h = jnp.maximum(x @ params["a1"] + params["ab1"], 0.0)
    attns = jax.nn.softmax(h @ params["a2"] + params["ab2"], axis=-1)   # (B, C)

    def component(c):
        h1 = jnp.maximum(x @ params["w1"][c] + params["b1"][c], 0.0)
        h2 = jnp.maximum(h1 @ params["w2"][c] + params["b2"][c], 0.0)
        return h2 @ params["w3"][c] + params["b3"][c]

    comps = jnp.stack([component(c) for c in range(params["w1"].shape[0])], axis=1)
    return jnp.sum(comps * attns[:, :, None], axis=1)


# ----------------------------------- main ---------------------------------------
if __name__ == "__main__":
    B, IN_F, OUT_F = 8, 16, 8
    C, H = 4, 32  # num_components, num_hidden_units  (C*H = 128, lane-dense)

    key = jax.random.PRNGKey(0)
    ks = jax.random.split(key, 12)
    scale = 0.1
    params = {
        # attention net: Linear(in, H) -> ReLU -> Linear(H, C)
        "a1": scale * jax.random.normal(ks[0], (IN_F, H), jnp.float32),
        "ab1": scale * jax.random.normal(ks[1], (1, H), jnp.float32),
        "a2": scale * jax.random.normal(ks[2], (H, C), jnp.float32),
        "ab2": scale * jax.random.normal(ks[3], (1, C), jnp.float32),
        # C components, each Linear(in,H) -> ReLU -> Linear(H,H) -> ReLU -> Linear(H,out)
        "w1": scale * jax.random.normal(ks[4], (C, IN_F, H), jnp.float32),
        "b1": scale * jax.random.normal(ks[5], (C, 1, H), jnp.float32),
        "w2": scale * jax.random.normal(ks[6], (C, H, H), jnp.float32),
        "b2": scale * jax.random.normal(ks[7], (C, 1, H), jnp.float32),
        "w3": scale * jax.random.normal(ks[8], (C, H, OUT_F), jnp.float32),
        "b3": scale * jax.random.normal(ks[9], (C, 1, OUT_F), jnp.float32),
    }

    x = jax.random.normal(ks[10], (B, IN_F), jnp.float32)

    forward = make_mixture_forward(params)          # one-time packing, jitted forward
    out = jax.block_until_ready(forward(x))

    ref = _reference_forward(x, params)
    # tolerance loosened deliberately for pl.reciprocal(approx=True) in the softmax
    np.testing.assert_allclose(np.asarray(out), np.asarray(ref), rtol=2e-3, atol=2e-3)

    print("KERNEL_OK")
</pallas_src>

<mosaic_0001>
module attributes {stable_mosaic.version = 11 : i64} {
  func.func @kernel(%arg0: i32, %arg1: memref<8x16xf32, #tpu.memory_space<vmem>>, %arg2: memref<680x128xf32, #tpu.memory_space<vmem>>, %arg3: memref<8x128xf32, #tpu.memory_space<vmem>>) attributes {dimension_semantics = [#tpu.dimension_semantics<parallel>], iteration_bounds = array<i64: 1>, scalar_prefetch = 0 : i64, scratch_operands = 0 : i64, tpu.core_type = #tpu.core_type<tc>, window_params = [{transform_indices = @transform_0, window_bounds = array<i64: 8, 16>}, {pipeline_mode = #tpu.pipeline_mode<synchronous>, transform_indices = @transform_1, window_bounds = array<i64: 680, 128>}, {transform_indices = @transform_2, window_bounds = array<i64: 8, 128>}]} {
    %c0 = arith.constant 0 : index
    %c0_0 = arith.constant 0 : index
    %0 = vector.load %arg1[%c0, %c0_0] : memref<8x16xf32, #tpu.memory_space<vmem>>, vector<8x16xf32>
    %c0_1 = arith.constant 0 : index
    %c0_2 = arith.constant 0 : index
    %1 = vector.load %arg2[%c0_1, %c0_2] : memref<680x128xf32, #tpu.memory_space<vmem>>, vector<16x128xf32>
    %c16 = arith.constant 16 : index
    %c0_3 = arith.constant 0 : index
    %2 = vector.load %arg2[%c16, %c0_3] : memref<680x128xf32, #tpu.memory_space<vmem>>, vector<16x128xf32>
    %c32 = arith.constant 32 : index
    %c0_4 = arith.constant 0 : index
    %3 = vector.load %arg2[%c32, %c0_4] : memref<680x128xf32, #tpu.memory_space<vmem>>, vector<1x128xf32>
    %c33 = arith.constant 33 : index
    %c0_5 = arith.constant 0 : index
    %4 = vector.load %arg2[%c33, %c0_5] : memref<680x128xf32, #tpu.memory_space<vmem>>, vector<1x128xf32>
    %c34 = arith.constant 34 : index
    %c0_6 = arith.constant 0 : index
    %5 = vector.load %arg2[%c34, %c0_6] : memref<680x128xf32, #tpu.memory_space<vmem>>, vector<1x128xf32>
    %c35 = arith.constant 35 : index
    %c0_7 = arith.constant 0 : index
    %6 = vector.load %arg2[%c35, %c0_7] : memref<680x128xf32, #tpu.memory_space<vmem>>, vector<1x128xf32>
    %c40 = arith.constant 40 : index
    %c0_8 = arith.constant 0 : index
    %7 = vector.load %arg2[%c40, %c0_8] : memref<680x128xf32, #tpu.memory_space<vmem>>, vector<128x128xf32>
    %c168 = arith.constant 168 : index
    %c0_9 = arith.constant 0 : index
    %8 = vector.load %arg2[%c168, %c0_9] : memref<680x128xf32, #tpu.memory_space<vmem>>, vector<128x128xf32>
    %c296 = arith.constant 296 : index
    %c0_10 = arith.constant 0 : index
    %9 = vector.load %arg2[%c296, %c0_10] : memref<680x128xf32, #tpu.memory_space<vmem>>, vector<128x128xf32>
    %c424 = arith.constant 424 : index
    %c0_11 = arith.constant 0 : index
    %10 = vector.load %arg2[%c424, %c0_11] : memref<680x128xf32, #tpu.memory_space<vmem>>, vector<128x128xf32>
    %c552 = arith.constant 552 : index
    %c0_12 = arith.constant 0 : index
    %11 = vector.load %arg2[%c552, %c0_12] : memref<680x128xf32, #tpu.memory_space<vmem>>, vector<128x128xf32>
    %cst = arith.constant dense<0.000000e+00> : vector<8x128xf32>
    %12 = tpu.matmul %0, %1, %cst {dimension_numbers = #tpu.dot_dimension_numbers<[1], [0], [0], [1], [0, 0, 1, 1], [], []>} : vector<8x16xf32>, vector<16x128xf32>, vector<8x128xf32> -> vector<8x128xf32>
    %13 = vector.broadcast %3 : vector<1x128xf32> to vector<8x128xf32>
    %14 = arith.addf %12, %13 : vector<8x128xf32>
    %cst_13 = arith.constant 0.000000e+00 : f32
    %15 = vector.broadcast %cst_13 : f32 to vector<8x128xf32>
    %16 = arith.maximumf %14, %15 : vector<8x128xf32>
    %cst_14 = arith.constant dense<0.000000e+00> : vector<8x128xf32>
    %17 = tpu.matmul %16, %7, %cst_14 {dimension_numbers = #tpu.dot_dimension_numbers<[1], [0], [0], [1], [0, 0, 1, 1], [], []>} : vector<8x128xf32>, vector<128x128xf32>, vector<8x128xf32> -> vector<8x128xf32>
    %18 = vector.broadcast %4 : vector<1x128xf32> to vector<8x128xf32>
    %19 = arith.addf %17, %18 : vector<8x128xf32>
    %cst_15 = arith.constant dense<0xFF800000> : vector<8xf32>
    %20 = vector.multi_reduction <maximumf>, %19, %cst_15 [1] : vector<8x128xf32> to vector<8xf32>
    %21 = vector.shape_cast %20 : vector<8xf32> to vector<8x1xf32>
    %22 = vector.broadcast %21 : vector<8x1xf32> to vector<8x128xf32>
    %23 = arith.subf %19, %22 : vector<8x128xf32>
    %24 = math.exp %23 : vector<8x128xf32>
    %cst_16 = arith.constant dense<0.000000e+00> : vector<8xf32>
    %25 = vector.multi_reduction <add>, %24, %cst_16 [1] : vector<8x128xf32> to vector<8xf32>
    %26 = vector.shape_cast %25 : vector<8xf32> to vector<8x1xf32>
    %27 = tpu.reciprocal %26 {approx = true} : vector<8x1xf32> -> vector<8x1xf32>
    %28 = vector.broadcast %27 : vector<8x1xf32> to vector<8x128xf32>
    %29 = arith.mulf %24, %28 : vector<8x128xf32>
    %cst_17 = arith.constant dense<0.000000e+00> : vector<8x128xf32>
    %30 = tpu.matmul %0, %2, %cst_17 {dimension_numbers = #tpu.dot_dimension_numbers<[1], [0], [0], [1], [0, 0, 1, 1], [], []>} : vector<8x16xf32>, vector<16x128xf32>, vector<8x128xf32> -> vector<8x128xf32>
    %31 = vector.broadcast %5 : vector<1x128xf32> to vector<8x128xf32>
    %32 = arith.addf %30, %31 : vector<8x128xf32>
    %cst_18 = arith.constant 0.000000e+00 : f32
    %33 = vector.broadcast %cst_18 : f32 to vector<8x128xf32>
    %34 = arith.maximumf %32, %33 : vector<8x128xf32>
    %cst_19 = arith.constant dense<0.000000e+00> : vector<8x128xf32>
    %35 = tpu.matmul %34, %8, %cst_19 {dimension_numbers = #tpu.dot_dimension_numbers<[1], [0], [0], [1], [0, 0, 1, 1], [], []>} : vector<8x128xf32>, vector<128x128xf32>, vector<8x128xf32> -> vector<8x128xf32>
    %36 = vector.broadcast %6 : vector<1x128xf32> to vector<8x128xf32>
    %37 = arith.addf %35, %36 : vector<8x128xf32>
    %cst_20 = arith.constant 0.000000e+00 : f32
    %38 = vector.broadcast %cst_20 : f32 to vector<8x128xf32>
    %39 = arith.maximumf %37, %38 : vector<8x128xf32>
    %cst_21 = arith.constant dense<0.000000e+00> : vector<8x128xf32>
    %40 = tpu.matmul %29, %10, %cst_21 {dimension_numbers = #tpu.dot_dimension_numbers<[1], [0], [0], [1], [0, 0, 1, 1], [], []>} : vector<8x128xf32>, vector<128x128xf32>, vector<8x128xf32> -> vector<8x128xf32>
    %41 = arith.mulf %39, %40 : vector<8x128xf32>
    %cst_22 = arith.constant dense<0.000000e+00> : vector<8x128xf32>
    %42 = tpu.matmul %41, %9, %cst_22 {dimension_numbers = #tpu.dot_dimension_numbers<[1], [0], [0], [1], [0, 0, 1, 1], [], []>} : vector<8x128xf32>, vector<128x128xf32>, vector<8x128xf32> -> vector<8x128xf32>
    %cst_23 = arith.constant dense<0.000000e+00> : vector<8x128xf32>
    %43 = tpu.matmul %29, %11, %cst_23 {dimension_numbers = #tpu.dot_dimension_numbers<[1], [0], [0], [1], [0, 0, 1, 1], [], []>} : vector<8x128xf32>, vector<128x128xf32>, vector<8x128xf32> -> vector<8x128xf32>
    %44 = arith.addf %42, %43 : vector<8x128xf32>
    %c0_24 = arith.constant 0 : index
    %c0_25 = arith.constant 0 : index
    %45 = vector.load %arg3[%c0_24, %c0_25] : memref<8x128xf32, #tpu.memory_space<vmem>>, vector<8x128xf32>
    tpu.vector_store %arg3[%c0_24, %c0_25], %44 {strides = array<i32>} : memref<8x128xf32, #tpu.memory_space<vmem>>, vector<8x128xf32>,
    return
  }
  func.func @transform_0(%arg0: i32) -> (i32, i32) {
    %c0_i32 = arith.constant 0 : i32
    %c0_i32_0 = arith.constant 0 : i32
    return %arg0, %c0_i32 : i32, i32
  }
  func.func @transform_1(%arg0: i32) -> (i32, i32) {
    %c0_i32 = arith.constant 0 : i32
    %c0_i32_0 = arith.constant 0 : i32
    %c0_i32_1 = arith.constant 0 : i32
    return %c0_i32, %c0_i32_0 : i32, i32
  }
  func.func @transform_2(%arg0: i32) -> (i32, i32) {
    %c0_i32 = arith.constant 0 : i32
    %c0_i32_0 = arith.constant 0 : i32
    return %arg0, %c0_i32 : i32, i32
  }
}

</mosaic_0001>

<llo_original>
// kernel: forward.1
$region0: #{forward.1}
  #allocation0 [shape = 'u32[]', space=smem, size = 0x4, offset = 0x4, fixed_abs, tag = 'smem constant byte address 0x4 - core index']
  #allocation1 [shape = 'u32[144,128]{1,0:T(1,128)}', space=vmem, size = 0x12000, scoped, tag = 'internal scratch']
  %s0 = inlined_call_operand.hbm [shape: f32[8,16], index: 0, kind: input, shape index: {}]
  %s1 = inlined_call_operand.hbm [shape: f32[680,128], index: 1, kind: input, shape index: {}]
  %s2 = inlined_call_operand.hbm [shape: f32[8,128], index: 2, kind: output, shape index: {}]
  %s3 = sld [smem:[#allocation0]]
  $region26: #{forward.1} parent=0
    _
  %s5 = ssub.s32 1, %s3
  %s6 = scalar_select 0, %s5, %s3
  $region1: #{forward.1} parent=0
    #allocation2 [shape = 'u8[4096]{0}', space=vmem, size = 0x1000, scoped, tag = 'input window, operand 0, single buffered']
    #allocation3 [shape = 's32[1]{0}', space=sflag, size = 0x4, scoped, tag = 'scoped memory for forward.1']
    #allocation4 [shape = 's32[1]{0}', space=sflag, size = 0x4, scoped, tag = 'scoped memory for forward.1']
    #allocation5 [shape = 'u8[348160]{0}', space=vmem, size = 0x55000, scoped, tag = 'input window, operand 1, single buffered']
    #allocation6 [shape = 's32[1]{0}', space=sflag, size = 0x4, scoped, tag = 'scoped memory for forward.1']
    #allocation7 [shape = 'u8[4096]{0}', space=vmem, size = 0x1000, scoped, tag = 'output window, operand 0, single buffered']
    %7 = vsyncpa [#allocation3], 0
    %8 = vsyncpa [#allocation6], 0
    %9 = vsyncpa [#allocation4], 0
    // Predicated region
    $region2: #{forward.1} parent=1 // pred_check
      _
    $region3: #{forward.1} parent=1 // pred_check_branch
      %11 = sbr.rel (0) target = $region5
    $region4: #{forward.1} parent=1 // pred_region
      %s13 = ssub.s32 128, 128
      %14 = vsyncadd [#allocation3], %s13
      %s16 = sshll.u32 [#allocation2], 4
      %s17 = int_to_ptr.vmem [resolvable:$true] %s16
      %19 = dma.hbm_to_vmem [thread:$0]  %s0, 128, %s17, [#allocation3]
    $region5: #{forward.1} parent=1 // pred_fallthru
      _
    // Predicated region
    $region6: #{forward.1} parent=1 // pred_check
      _
    $region7: #{forward.1} parent=1 // pred_check_branch
      %21 = sbr.rel (0) target = $region9
    $region8: #{forward.1} parent=1 // pred_region
      %s23 = ssub.s32 10880, 10880
      %24 = vsyncadd [#allocation6], %s23
      %s25 = sshll.u32 [#allocation5], 4
      %s26 = int_to_ptr.vmem [resolvable:$true] %s25
      %31 = dma.hbm_to_vmem [thread:$0]  %s1, 10880, %s26, [#allocation6], 128, 128, 8
    $region9: #{forward.1} parent=1 // pred_fallthru
      _
    // Predicated region
    $region10: #{forward.1} parent=1 // pred_check
      _
    $region11: #{forward.1} parent=1 // pred_check_branch
      %33 = sbr.rel (0) target = $region13
    $region12: #{forward.1} parent=1 // pred_region
      %34 = dma.done [#allocation3], 128
    $region13: #{forward.1} parent=1 // pred_fallthru
      _
    // Predicated region
    $region14: #{forward.1} parent=1 // pred_check
      _
    $region15: #{forward.1} parent=1 // pred_check_branch
      %36 = sbr.rel (0) target = $region17
    $region16: #{forward.1} parent=1 // pred_region
      %37 = dma.done [#allocation6], 10880
    $region17: #{forward.1} parent=1 // pred_fallthru
      _
    %v38 = vld [vmem:[#allocation2] sm:$0xff]
    %v39 = vld [vmem:[#allocation5] sm:$0xff]
    %v40 = vld [vmem:[#allocation5 + $0x8] sm:$0xff]
    %v41 = vld [vmem:[#allocation5 + $0x10] sm:$0xff]
    %v42 = vld [vmem:[#allocation5 + $0x18] sm:$0xff]
    %v43 = vld [vmem:[#allocation5 + $0x20] sm:$0x1]
    %v44 = vld [vmem:[#allocation5 + $0x21] sm:$0x1]
    %v45 = vld [vmem:[#allocation5 + $0x22] sm:$0x1]
    %v46 = vld [vmem:[#allocation5 + $0x23] sm:$0x1]
    %v47 = vld [vmem:[#allocation5 + $0x28] sm:$0xff]
    %v48 = vld [vmem:[#allocation5 + $0x30] sm:$0xff]
    %v49 = vld [vmem:[#allocation5 + $0x38] sm:$0xff]
    %v50 = vld [vmem:[#allocation5 + $0x40] sm:$0xff]
    %v51 = vld [vmem:[#allocation5 + $0x48] sm:$0xff]
    %v52 = vld [vmem:[#allocation5 + $0x50] sm:$0xff]
    %v53 = vld [vmem:[#allocation5 + $0x58] sm:$0xff]
    %v54 = vld [vmem:[#allocation5 + $0x60] sm:$0xff]
    %v55 = vld [vmem:[#allocation5 + $0x68] sm:$0xff]
    %v56 = vld [vmem:[#allocation5 + $0x70] sm:$0xff]
    %v57 = vld [vmem:[#allocation5 + $0x78] sm:$0xff]
    %v58 = vld [vmem:[#allocation5 + $0x80] sm:$0xff]
    %v59 = vld [vmem:[#allocation5 + $0x88] sm:$0xff]
    %v60 = vld [vmem:[#allocation5 + $0x90] sm:$0xff]
    %v61 = vld [vmem:[#allocation5 + $0x98] sm:$0xff]
    %v62 = vld [vmem:[#allocation5 + $0xa0] sm:$0xff]
    %v63 = vld [vmem:[#allocation5 + $0xa8] sm:$0xff]
    %v64 = vld [vmem:[#allocation5 + $0xb0] sm:$0xff]
    %v65 = vld [vmem:[#allocation5 + $0xb8] sm:$0xff]
    %v66 = vld [vmem:[#allocation5 + $0xc0] sm:$0xff]
    %v67 = vld [vmem:[#allocation5 + $0xc8] sm:$0xff]
    %v68 = vld [vmem:[#allocation5 + $0xd0] sm:$0xff]
    %v69 = vld [vmem:[#allocation5 + $0xd8] sm:$0xff]
    %v70 = vld [vmem:[#allocation5 + $0xe0] sm:$0xff]
    %v71 = vld [vmem:[#allocation5 + $0xe8] sm:$0xff]
    %v72 = vld [vmem:[#allocation5 + $0xf0] sm:$0xff]
    %v73 = vld [vmem:[#allocation5 + $0xf8] sm:$0xff]
    %v74 = vld [vmem:[#allocation5 + $0x100] sm:$0xff]
    %v75 = vld [vmem:[#allocation5 + $0x108] sm:$0xff]
    %v76 = vld [vmem:[#allocation5 + $0x110] sm:$0xff]
    %v77 = vld [vmem:[#allocation5 + $0x118] sm:$0xff]
    %v78 = vld [vmem:[#allocation5 + $0x120] sm:$0xff]
    %v79 = vld [vmem:[#allocation5 + $0x128] sm:$0xff]
    %v80 = vld [vmem:[#allocation5 + $0x130] sm:$0xff]
    %v81 = vld [vmem:[#allocation5 + $0x138] sm:$0xff]
    %v82 = vld [vmem:[#allocation5 + $0x140] sm:$0xff]
    %v83 = vld [vmem:[#allocation5 + $0x148] sm:$0xff]
    %v84 = vld [vmem:[#allocation5 + $0x150] sm:$0xff]
    %v85 = vld [vmem:[#allocation5 + $0x158] sm:$0xff]
    %v86 = vld [vmem:[#allocation5 + $0x160] sm:$0xff]
    %v87 = vld [vmem:[#allocation5 + $0x168] sm:$0xff]
    %v88 = vld [vmem:[#allocation5 + $0x170] sm:$0xff]
    %v89 = vld [vmem:[#allocation5 + $0x178] sm:$0xff]
    %v90 = vld [vmem:[#allocation5 + $0x180] sm:$0xff]
    %v91 = vld [vmem:[#allocation5 + $0x188] sm:$0xff]
    %v92 = vld [vmem:[#allocation5 + $0x190] sm:$0xff]
    %v93 = vld [vmem:[#allocation5 + $0x198] sm:$0xff]
    %v94 = vld [vmem:[#allocation5 + $0x1a0] sm:$0xff]
    %v95 = vld [vmem:[#allocation5 + $0x1a8] sm:$0xff]
    %v96 = vld [vmem:[#allocation5 + $0x1b0] sm:$0xff]
    %v97 = vld [vmem:[#allocation5 + $0x1b8] sm:$0xff]
    %v98 = vld [vmem:[#allocation5 + $0x1c0] sm:$0xff]
    %v99 = vld [vmem:[#allocation5 + $0x1c8] sm:$0xff]
    %v100 = vld [vmem:[#allocation5 + $0x1d0] sm:$0xff]
    %v101 = vld [vmem:[#allocation5 + $0x1d8] sm:$0xff]
    %v102 = vld [vmem:[#allocation5 + $0x1e0] sm:$0xff]
    %v103 = vld [vmem:[#allocation5 + $0x1e8] sm:$0xff]
    %v104 = vld [vmem:[#allocation5 + $0x1f0] sm:$0xff]
    %v105 = vld [vmem:[#allocation5 + $0x1f8] sm:$0xff]
    %v106 = vld [vmem:[#allocation5 + $0x200] sm:$0xff]
    %v107 = vld [vmem:[#allocation5 + $0x208] sm:$0xff]
    %v108 = vld [vmem:[#allocation5 + $0x210] sm:$0xff]
    %v109 = vld [vmem:[#allocation5 + $0x218] sm:$0xff]
    %v110 = vld [vmem:[#allocation5 + $0x220] sm:$0xff]
    %v111 = vld [vmem:[#allocation5 + $0x228] sm:$0xff]
    %v112 = vld [vmem:[#allocation5 + $0x230] sm:$0xff]
    %v113 = vld [vmem:[#allocation5 + $0x238] sm:$0xff]
    %v114 = vld [vmem:[#allocation5 + $0x240] sm:$0xff]
    %v115 = vld [vmem:[#allocation5 + $0x248] sm:$0xff]
    %v116 = vld [vmem:[#allocation5 + $0x250] sm:$0xff]
    %v117 = vld [vmem:[#allocation5 + $0x258] sm:$0xff]
    %v118 = vld [vmem:[#allocation5 + $0x260] sm:$0xff]
    %v119 = vld [vmem:[#allocation5 + $0x268] sm:$0xff]
    %v120 = vld [vmem:[#allocation5 + $0x270] sm:$0xff]
    %v121 = vld [vmem:[#allocation5 + $0x278] sm:$0xff]
    %v122 = vld [vmem:[#allocation5 + $0x280] sm:$0xff]
    %v123 = vld [vmem:[#allocation5 + $0x288] sm:$0xff]
    %v124 = vld [vmem:[#allocation5 + $0x290] sm:$0xff]
    %v125 = vld [vmem:[#allocation5 + $0x298] sm:$0xff]
    %v126 = vld [vmem:[#allocation5 + $0x2a0] sm:$0xff]
    %v127 = vlaneseq
    %v128 = vshrl.u32 %v127, 7
    %v129 = vsub.s32 0, %v128
    %v130 = vrot.slane %v43, %v129
    %vm131 = vcmask 130048
    %v133 = vsel %vm131, %v38, 0
    %135 = vmatprep.subr.mxu0 0.0
    %136 = vmatpush1.msra.mxu0 0.0
    %137 = vmatprep.subr.mxu0 0.0
    %138 = vmatpush1.msra.mxu0 0.0
    %139 = vmatprep.subr.mxu0 0.0
    %140 = vmatpush1.msra.mxu0 0.0
    %141 = vmatprep.subr.mxu0 0.0
    %142 = vmatpush1.msra.mxu0 0.0
    %143 = vmatprep.subr.mxu0 0.0
    %144 = vmatpush1.msra.mxu0 0.0
    %145 = vmatprep.subr.mxu0 0.0
    %146 = vmatpush1.msra.mxu0 0.0
    %147 = vmatprep.subr.mxu0 0.0
    %148 = vmatpush1.msra.mxu0 0.0
    %149 = vmatprep.subr.mxu0 0.0
    %150 = vmatpush1.msra.mxu0 0.0
    %151 = vmatprep.subr.mxu0 0.0
    %152 = vmatpush1.msra.mxu0 0.0
    %153 = vmatprep.subr.mxu0 0.0
    %154 = vmatpush1.msra.mxu0 0.0
    %155 = vmatprep.subr.mxu0 0.0
    %156 = vmatpush1.msra.mxu0 0.0
    %157 = vmatprep.subr.mxu0 0.0
    %158 = vmatpush1.msra.mxu0 0.0
    %159 = vmatprep.subr.mxu0 0.0
    %160 = vmatpush1.msra.mxu0 0.0
    %161 = vmatprep.subr.mxu0 0.0
    %162 = vmatpush1.msra.mxu0 0.0
    %163 = vmatprep.subr.mxu0 0.0
    %164 = vmatpush1.msra.mxu0 %v40
    %165 = vmatprep.subr.mxu0 0.0
    %166 = vmatpush1.msra.mxu0 %v39
    %167 = vmatprep.subr.mxu0 0.0
    %168 = vmatpush2.msra.mxu0 0.0
    %169 = vmatprep.subr.mxu0 0.0
    %170 = vmatpush2.msra.mxu0 0.0
    %171 = vmatprep.subr.mxu0 0.0
    %172 = vmatpush2.msra.mxu0 0.0
    %173 = vmatprep.subr.mxu0 0.0
    %174 = vmatpush2.msra.mxu0 0.0
    %175 = vmatprep.subr.mxu0 0.0
    %176 = vmatpush2.msra.mxu0 0.0
    %177 = vmatprep.subr.mxu0 0.0
    %178 = vmatpush2.msra.mxu0 0.0
    %179 = vmatprep.subr.mxu0 0.0
    %180 = vmatpush2.msra.mxu0 0.0
    %181 = vmatprep.subr.mxu0 0.0
    %182 = vmatpush2.msra.mxu0 0.0
    %183 = vmatprep.subr.mxu0 0.0
    %184 = vmatpush2.msra.mxu0 0.0
    %185 = vmatprep.subr.mxu0 0.0
    %186 = vmatpush2.msra.mxu0 0.0
    %187 = vmatprep.subr.mxu0 0.0
    %188 = vmatpush2.msra.mxu0 0.0
    %189 = vmatprep.subr.mxu0 0.0
    %190 = vmatpush2.msra.mxu0 0.0
    %191 = vmatprep.subr.mxu0 0.0
    %192 = vmatpush2.msra.mxu0 0.0
    %193 = vmatprep.subr.mxu0 0.0
    %194 = vmatpush2.msra.mxu0 0.0
    %195 = vmatprep.subr.mxu0 0.0
    %196 = vmatpush2.msra.mxu0 0.0
    %197 = vmatprep.subr.mxu0 0.0
    %198 = vmatpush2.msra.mxu0 0.0
    %199 = vmatprep.mubr.f32.mxu0 0.0
    %200 = vmatmul.mubr.f32.gmra.mxu0 %v133
    %v201 = vpop.f32.mrf.mxu0
    %v202 = vadd.f32 %v130, %v201
    %v203 = vpop.f32.mrf.mxu0
    %204 = vdwg.mxu0
    %v205 = vmax.f32 %v202, 0.0
    %v206 = vlaneseq
    %v207 = vshrl.u32 %v206, 7
    %v208 = vsub.s32 0, %v207
    %v209 = vrot.slane %v44, %v208
    %210 = vmatprep.subr.mxu0 0.0
    %211 = vmatpush1.msra.mxu0 %v62
    %212 = vmatprep.subr.mxu0 0.0
    %213 = vmatpush1.msra.mxu0 %v61
    %214 = vmatprep.subr.mxu0 0.0
    %215 = vmatpush1.msra.mxu0 %v60
    %216 = vmatprep.subr.mxu0 0.0
    %217 = vmatpush1.msra.mxu0 %v59
    %218 = vmatprep.subr.mxu0 0.0
    %219 = vmatpush1.msra.mxu0 %v58
    %220 = vmatprep.subr.mxu0 0.0
    %221 = vmatpush1.msra.mxu0 %v57
    %222 = vmatprep.subr.mxu0 0.0
    %223 = vmatpush1.msra.mxu0 %v56
    %224 = vmatprep.subr.mxu0 0.0
    %225 = vmatpush1.msra.mxu0 %v55
    %226 = vmatprep.subr.mxu0 0.0
    %227 = vmatpush1.msra.mxu0 %v54
    %228 = vmatprep.subr.mxu0 0.0
    %229 = vmatpush1.msra.mxu0 %v53
    %230 = vmatprep.subr.mxu0 0.0
    %231 = vmatpush1.msra.mxu0 %v52
    %232 = vmatprep.subr.mxu0 0.0
    %233 = vmatpush1.msra.mxu0 %v51
    %234 = vmatprep.subr.mxu0 0.0
    %235 = vmatpush1.msra.mxu0 %v50
    %236 = vmatprep.subr.mxu0 0.0
    %237 = vmatpush1.msra.mxu0 %v49
    %238 = vmatprep.subr.mxu0 0.0
    %239 = vmatpush1.msra.mxu0 %v48
    %240 = vmatprep.subr.mxu0 0.0
    %241 = vmatpush1.msra.mxu0 %v47
    %242 = vmatprep.subr.mxu0 0.0
    %243 = vmatpush2.msra.mxu0 0.0
    %244 = vmatprep.subr.mxu0 0.0
    %245 = vmatpush2.msra.mxu0 0.0
    %246 = vmatprep.subr.mxu0 0.0
    %247 = vmatpush2.msra.mxu0 0.0
    %248 = vmatprep.subr.mxu0 0.0
    %249 = vmatpush2.msra.mxu0 0.0
    %250 = vmatprep.subr.mxu0 0.0
    %251 = vmatpush2.msra.mxu0 0.0
    %252 = vmatprep.subr.mxu0 0.0
    %253 = vmatpush2.msra.mxu0 0.0
    %254 = vmatprep.subr.mxu0 0.0
    %255 = vmatpush2.msra.mxu0 0.0
    %256 = vmatprep.subr.mxu0 0.0
    %257 = vmatpush2.msra.mxu0 0.0
    %258 = vmatprep.subr.mxu0 0.0
    %259 = vmatpush2.msra.mxu0 0.0
    %260 = vmatprep.subr.mxu0 0.0
    %261 = vmatpush2.msra.mxu0 0.0
    %262 = vmatprep.subr.mxu0 0.0
    %263 = vmatpush2.msra.mxu0 0.0
    %264 = vmatprep.subr.mxu0 0.0
    %265 = vmatpush2.msra.mxu0 0.0
    %266 = vmatprep.subr.mxu0 0.0
    %267 = vmatpush2.msra.mxu0 0.0
    %268 = vmatprep.subr.mxu0 0.0
    %269 = vmatpush2.msra.mxu0 0.0
    %270 = vmatprep.subr.mxu0 0.0
    %271 = vmatpush2.msra.mxu0 0.0
    %272 = vmatprep.subr.mxu0 0.0
    %273 = vmatpush2.msra.mxu0 0.0
    %274 = vmatprep.mubr.f32.mxu0 0.0
    %275 = vmatmul.mubr.f32.gmra.mxu0 %v205
    %v276 = vpop.f32.mrf.mxu0
    %v277 = vadd.f32 %v209, %v276
    %v278 = vpop.f32.mrf.mxu0
    %279 = vdwg.mxu0
    %280 = vmax.xlane.f32.xlu0 %v277
    %v281 = vpop.xlane.xlu0 %280
    %v282 = vsub.f32 %v277, %v281
    %v283 = vmul.f32 %v282, 1.442695
    %v284 = vpow.pop %v283
    %285 = vadd.xlane.f32.xlu0 %v284
    %v286 = vpop.xlane.xlu0 %285
    %v287 = vrcp.pop %v286
    %v288 = vmul.f32 %v284, %v287
    %v289 = vlaneseq
    %v290 = vshrl.u32 %v289, 7
    %v291 = vsub.s32 0, %v290
    %v292 = vrot.slane %v45, %v291
    %293 = vmatprep.subr.mxu0 0.0
    %294 = vmatpush1.msra.mxu0 0.0
    %295 = vmatprep.subr.mxu0 0.0
    %296 = vmatpush1.msra.mxu0 0.0
    %297 = vmatprep.subr.mxu0 0.0
    %298 = vmatpush1.msra.mxu0 0.0
    %299 = vmatprep.subr.mxu0 0.0
    %300 = vmatpush1.msra.mxu0 0.0
    %301 = vmatprep.subr.mxu0 0.0
    %302 = vmatpush1.msra.mxu0 0.0
    %303 = vmatprep.subr.mxu0 0.0
    %304 = vmatpush1.msra.mxu0 0.0
    %305 = vmatprep.subr.mxu0 0.0
    %306 = vmatpush1.msra.mxu0 0.0
    %307 = vmatprep.subr.mxu0 0.0
    %308 = vmatpush1.msra.mxu0 0.0
    %309 = vmatprep.subr.mxu0 0.0
    %310 = vmatpush1.msra.mxu0 0.0
    %311 = vmatprep.subr.mxu0 0.0
    %312 = vmatpush1.msra.mxu0 0.0
    %313 = vmatprep.subr.mxu0 0.0
    %314 = vmatpush1.msra.mxu0 0.0
    %315 = vmatprep.subr.mxu0 0.0
    %316 = vmatpush1.msra.mxu0 0.0
    %317 = vmatprep.subr.mxu0 0.0
    %318 = vmatpush1.msra.mxu0 0.0
    %319 = vmatprep.subr.mxu0 0.0
    %320 = vmatpush1.msra.mxu0 0.0
    %321 = vmatprep.subr.mxu0 0.0
    %322 = vmatpush1.msra.mxu0 %v42
    %323 = vmatprep.subr.mxu0 0.0
    %324 = vmatpush1.msra.mxu0 %v41
    %325 = vmatprep.subr.mxu0 0.0
    %326 = vmatpush2.msra.mxu0 0.0
    %327 = vmatprep.subr.mxu0 0.0
    %328 = vmatpush2.msra.mxu0 0.0
    %329 = vmatprep.subr.mxu0 0.0
    %330 = vmatpush2.msra.mxu0 0.0
    %331 = vmatprep.subr.mxu0 0.0
    %332 = vmatpush2.msra.mxu0 0.0
    %333 = vmatprep.subr.mxu0 0.0
    %334 = vmatpush2.msra.mxu0 0.0
    %335 = vmatprep.subr.mxu0 0.0
    %336 = vmatpush2.msra.mxu0 0.0
    %337 = vmatprep.subr.mxu0 0.0
    %338 = vmatpush2.msra.mxu0 0.0
    %339 = vmatprep.subr.mxu0 0.0
    %340 = vmatpush2.msra.mxu0 0.0
    %341 = vmatprep.subr.mxu0 0.0
    %342 = vmatpush2.msra.mxu0 0.0
    %343 = vmatprep.subr.mxu0 0.0
    %344 = vmatpush2.msra.mxu0 0.0
    %345 = vmatprep.subr.mxu0 0.0
    %346 = vmatpush2.msra.mxu0 0.0
    %347 = vmatprep.subr.mxu0 0.0
    %348 = vmatpush2.msra.mxu0 0.0
    %349 = vmatprep.subr.mxu0 0.0
    %350 = vmatpush2.msra.mxu0 0.0
    %351 = vmatprep.subr.mxu0 0.0
    %352 = vmatpush2.msra.mxu0 0.0
    %353 = vmatprep.subr.mxu0 0.0
    %354 = vmatpush2.msra.mxu0 0.0
    %355 = vmatprep.subr.mxu0 0.0
    %356 = vmatpush2.msra.mxu0 0.0
    %357 = vmatprep.mubr.f32.mxu0 0.0
    %358 = vmatmul.mubr.f32.gmra.mxu0 %v133
    %v359 = vpop.f32.mrf.mxu0
    %v360 = vadd.f32 %v292, %v359
    %v361 = vpop.f32.mrf.mxu0
    %362 = vdwg.mxu0
    %v363 = vmax.f32 %v360, 0.0
    %v364 = vlaneseq
    %v365 = vshrl.u32 %v364, 7
    %v366 = vsub.s32 0, %v365
    %v367 = vrot.slane %v46, %v366
    %368 = vmatprep.subr.mxu0 0.0
    %369 = vmatpush1.msra.mxu0 %v78
    %370 = vmatprep.subr.mxu0 0.0
    %371 = vmatpush1.msra.mxu0 %v77
    %372 = vmatprep.subr.mxu0 0.0
    %373 = vmatpush1.msra.mxu0 %v76
    %374 = vmatprep.subr.mxu0 0.0
    %375 = vmatpush1.msra.mxu0 %v75
    %376 = vmatprep.subr.mxu0 0.0
    %377 = vmatpush1.msra.mxu0 %v74
    %378 = vmatprep.subr.mxu0 0.0
    %379 = vmatpush1.msra.mxu0 %v73
    %380 = vmatprep.subr.mxu0 0.0
    %381 = vmatpush1.msra.mxu0 %v72
    %382 = vmatprep.subr.mxu0 0.0
    %383 = vmatpush1.msra.mxu0 %v71
    %384 = vmatprep.subr.mxu0 0.0
    %385 = vmatpush1.msra.mxu0 %v70
    %386 = vmatprep.subr.mxu0 0.0
    %387 = vmatpush1.msra.mxu0 %v69
    %388 = vmatprep.subr.mxu0 0.0
    %389 = vmatpush1.msra.mxu0 %v68
    %390 = vmatprep.subr.mxu0 0.0
    %391 = vmatpush1.msra.mxu0 %v67
    %392 = vmatprep.subr.mxu0 0.0
    %393 = vmatpush1.msra.mxu0 %v66
    %394 = vmatprep.subr.mxu0 0.0
    %395 = vmatpush1.msra.mxu0 %v65
    %396 = vmatprep.subr.mxu0 0.0
    %397 = vmatpush1.msra.mxu0 %v64
    %398 = vmatprep.subr.mxu0 0.0
    %399 = vmatpush1.msra.mxu0 %v63
    %400 = vmatprep.subr.mxu0 0.0
    %401 = vmatpush2.msra.mxu0 0.0
    %402 = vmatprep.subr.mxu0 0.0
    %403 = vmatpush2.msra.mxu0 0.0
    %404 = vmatprep.subr.mxu0 0.0
    %405 = vmatpush2.msra.mxu0 0.0
    %406 = vmatprep.subr.mxu0 0.0
    %407 = vmatpush2.msra.mxu0 0.0
    %408 = vmatprep.subr.mxu0 0.0
    %409 = vmatpush2.msra.mxu0 0.0
    %410 = vmatprep.subr.mxu0 0.0
    %411 = vmatpush2.msra.mxu0 0.0
    %412 = vmatprep.subr.mxu0 0.0
    %413 = vmatpush2.msra.mxu0 0.0
    %414 = vmatprep.subr.mxu0 0.0
    %415 = vmatpush2.msra.mxu0 0.0
    %416 = vmatprep.subr.mxu0 0.0
    %417 = vmatpush2.msra.mxu0 0.0
    %418 = vmatprep.subr.mxu0 0.0
    %419 = vmatpush2.msra.mxu0 0.0
    %420 = vmatprep.subr.mxu0 0.0
    %421 = vmatpush2.msra.mxu0 0.0
    %422 = vmatprep.subr.mxu0 0.0
    %423 = vmatpush2.msra.mxu0 0.0
    %424 = vmatprep.subr.mxu0 0.0
    %425 = vmatpush2.msra.mxu0 0.0
    %426 = vmatprep.subr.mxu0 0.0
    %427 = vmatpush2.msra.mxu0 0.0
    %428 = vmatprep.subr.mxu0 0.0
    %429 = vmatpush2.msra.mxu0 0.0
    %430 = vmatprep.subr.mxu0 0.0
    %431 = vmatpush2.msra.mxu0 0.0
    %432 = vmatprep.mubr.f32.mxu0 0.0
    %433 = vmatmul.mubr.f32.gmra.mxu0 %v363
    %v434 = vpop.f32.mrf.mxu0
    %v435 = vadd.f32 %v367, %v434
    %v436 = vpop.f32.mrf.mxu0
    %437 = vdwg.mxu0
    %v438 = vmax.f32 %v435, 0.0
    %439 = vmatprep.subr.mxu0 0.0
    %440 = vmatpush1.msra.mxu0 %v110
    %441 = vmatprep.subr.mxu0 0.0
    %442 = vmatpush1.msra.mxu0 %v109
    %443 = vmatprep.subr.mxu0 0.0
    %444 = vmatpush1.msra.mxu0 %v108
    %445 = vmatprep.subr.mxu0 0.0
    %446 = vmatpush1.msra.mxu0 %v107
    %447 = vmatprep.subr.mxu0 0.0
    %448 = vmatpush1.msra.mxu0 %v106
    %449 = vmatprep.subr.mxu0 0.0
    %450 = vmatpush1.msra.mxu0 %v105
    %451 = vmatprep.subr.mxu0 0.0
    %452 = vmatpush1.msra.mxu0 %v104
    %453 = vmatprep.subr.mxu0 0.0
    %454 = vmatpush1.msra.mxu0 %v103
    %455 = vmatprep.subr.mxu0 0.0
    %456 = vmatpush1.msra.mxu0 %v102
    %457 = vmatprep.subr.mxu0 0.0
    %458 = vmatpush1.msra.mxu0 %v101
    %459 = vmatprep.subr.mxu0 0.0
    %460 = vmatpush1.msra.mxu0 %v100
    %461 = vmatprep.subr.mxu0 0.0
    %462 = vmatpush1.msra.mxu0 %v99
    %463 = vmatprep.subr.mxu0 0.0
    %464 = vmatpush1.msra.mxu0 %v98
    %465 = vmatprep.subr.mxu0 0.0
    %466 = vmatpush1.msra.mxu0 %v97
    %467 = vmatprep.subr.mxu0 0.0
    %468 = vmatpush1.msra.mxu0 %v96
    %469 = vmatprep.subr.mxu0 0.0
    %470 = vmatpush1.msra.mxu0 %v95
    %471 = vmatprep.subr.mxu0 0.0
    %472 = vmatpush2.msra.mxu0 0.0
    %473 = vmatprep.subr.mxu0 0.0
    %474 = vmatpush2.msra.mxu0 0.0
    %475 = vmatprep.subr.mxu0 0.0
    %476 = vmatpush2.msra.mxu0 0.0
    %477 = vmatprep.subr.mxu0 0.0
    %478 = vmatpush2.msra.mxu0 0.0
    %479 = vmatprep.subr.mxu0 0.0
    %480 = vmatpush2.msra.mxu0 0.0
    %481 = vmatprep.subr.mxu0 0.0
    %482 = vmatpush2.msra.mxu0 0.0
    %483 = vmatprep.subr.mxu0 0.0
    %484 = vmatpush2.msra.mxu0 0.0
    %485 = vmatprep.subr.mxu0 0.0
    %486 = vmatpush2.msra.mxu0 0.0
    %487 = vmatprep.subr.mxu0 0.0
    %488 = vmatpush2.msra.mxu0 0.0
    %489 = vmatprep.subr.mxu0 0.0
    %490 = vmatpush2.msra.mxu0 0.0
    %491 = vmatprep.subr.mxu0 0.0
    %492 = vmatpush2.msra.mxu0 0.0
    %493 = vmatprep.subr.mxu0 0.0
    %494 = vmatpush2.msra.mxu0 0.0
    %495 = vmatprep.subr.mxu0 0.0
    %496 = vmatpush2.msra.mxu0 0.0
    %497 = vmatprep.subr.mxu0 0.0
    %498 = vmatpush2.msra.mxu0 0.0
    %499 = vmatprep.subr.mxu0 0.0
    %500 = vmatpush2.msra.mxu0 0.0
    %501 = vmatprep.subr.mxu0 0.0
    %502 = vmatpush2.msra.mxu0 0.0
    %503 = vmatprep.mubr.f32.mxu0 0.0
    %504 = vmatmul.mubr.f32.gmra.mxu0 %v288
    %v505 = vpop.f32.mrf.mxu0
    %v506 = vadd.f32 0.0, %v505
    %v507 = vpop.f32.mrf.mxu0
    %508 = vdwg.mxu0
    %v509 = vmul.f32 %v438, %v506
    %510 = vmatprep.subr.mxu0 0.0
    %511 = vmatpush1.msra.mxu0 %v126
    %512 = vmatprep.subr.mxu0 0.0
    %513 = vmatpush1.msra.mxu0 %v125
    %514 = vmatprep.subr.mxu0 0.0
    %515 = vmatpush1.msra.mxu0 %v124
    %516 = vmatprep.subr.mxu0 0.0
    %517 = vmatpush1.msra.mxu0 %v123
    %518 = vmatprep.subr.mxu0 0.0
    %519 = vmatpush1.msra.mxu0 %v122
    %520 = vmatprep.subr.mxu0 0.0
    %521 = vmatpush1.msra.mxu0 %v121
    %522 = vmatprep.subr.mxu0 0.0
    %523 = vmatpush1.msra.mxu0 %v120
    %524 = vmatprep.subr.mxu0 0.0
    %525 = vmatpush1.msra.mxu0 %v119
    %526 = vmatprep.subr.mxu0 0.0
    %527 = vmatpush1.msra.mxu0 %v118
    %528 = vmatprep.subr.mxu0 0.0
    %529 = vmatpush1.msra.mxu0 %v117
    %530 = vmatprep.subr.mxu0 0.0
    %531 = vmatpush1.msra.mxu0 %v116
    %532 = vmatprep.subr.mxu0 0.0
    %533 = vmatpush1.msra.mxu0 %v115
    %534 = vmatprep.subr.mxu0 0.0
    %535 = vmatpush1.msra.mxu0 %v114
    %536 = vmatprep.subr.mxu0 0.0
    %537 = vmatpush1.msra.mxu0 %v113
    %538 = vmatprep.subr.mxu0 0.0
    %539 = vmatpush1.msra.mxu0 %v112
    %540 = vmatprep.subr.mxu0 0.0
    %541 = vmatpush1.msra.mxu0 %v111
    %542 = vmatprep.subr.mxu0 0.0
    %543 = vmatpush2.msra.mxu0 0.0
    %544 = vmatprep.subr.mxu0 0.0
    %545 = vmatpush2.msra.mxu0 0.0
    %546 = vmatprep.subr.mxu0 0.0
    %547 = vmatpush2.msra.mxu0 0.0
    %548 = vmatprep.subr.mxu0 0.0
    %549 = vmatpush2.msra.mxu0 0.0
    %550 = vmatprep.subr.mxu0 0.0
    %551 = vmatpush2.msra.mxu0 0.0
    %552 = vmatprep.subr.mxu0 0.0
    %553 = vmatpush2.msra.mxu0 0.0
    %554 = vmatprep.subr.mxu0 0.0
    %555 = vmatpush2.msra.mxu0 0.0
    %556 = vmatprep.subr.mxu0 0.0
    %557 = vmatpush2.msra.mxu0 0.0
    %558 = vmatprep.subr.mxu0 0.0
    %559 = vmatpush2.msra.mxu0 0.0
    %560 = vmatprep.subr.mxu0 0.0
    %561 = vmatpush2.msra.mxu0 0.0
    %562 = vmatprep.subr.mxu0 0.0
    %563 = vmatpush2.msra.mxu0 0.0
    %564 = vmatprep.subr.mxu0 0.0
    %565 = vmatpush2.msra.mxu0 0.0
    %566 = vmatprep.subr.mxu0 0.0
    %567 = vmatpush2.msra.mxu0 0.0
    %568 = vmatprep.subr.mxu0 0.0
    %569 = vmatpush2.msra.mxu0 0.0
    %570 = vmatprep.subr.mxu0 0.0
    %571 = vmatpush2.msra.mxu0 0.0
    %572 = vmatprep.subr.mxu0 0.0
    %573 = vmatpush2.msra.mxu0 0.0
    %574 = vmatprep.mubr.f32.mxu0 0.0
    %575 = vmatmul.mubr.f32.gmra.mxu0 %v288
    %v576 = vpop.f32.mrf.mxu0
    %v577 = vadd.f32 0.0, %v576
    %v578 = vpop.f32.mrf.mxu0
    %579 = vdwg.mxu0
    %580 = vmatprep.subr.mxu0 0.0
    %581 = vmatpush1.msra.mxu0 %v94
    %582 = vmatprep.subr.mxu0 0.0
    %583 = vmatpush1.msra.mxu0 %v93
    %584 = vmatprep.subr.mxu0 0.0
    %585 = vmatpush1.msra.mxu0 %v92
    %586 = vmatprep.subr.mxu0 0.0
    %587 = vmatpush1.msra.mxu0 %v91
    %588 = vmatprep.subr.mxu0 0.0
    %589 = vmatpush1.msra.mxu0 %v90
    %590 = vmatprep.subr.mxu0 0.0
    %591 = vmatpush1.msra.mxu0 %v89
    %592 = vmatprep.subr.mxu0 0.0
    %593 = vmatpush1.msra.mxu0 %v88
    %594 = vmatprep.subr.mxu0 0.0
    %595 = vmatpush1.msra.mxu0 %v87
    %596 = vmatprep.subr.mxu0 0.0
    %597 = vmatpush1.msra.mxu0 %v86
    %598 = vmatprep.subr.mxu0 0.0
    %599 = vmatpush1.msra.mxu0 %v85
    %600 = vmatprep.subr.mxu0 0.0
    %601 = vmatpush1.msra.mxu0 %v84
    %602 = vmatprep.subr.mxu0 0.0
    %603 = vmatpush1.msra.mxu0 %v83
    %604 = vmatprep.subr.mxu0 0.0
    %605 = vmatpush1.msra.mxu0 %v82
    %606 = vmatprep.subr.mxu0 0.0
    %607 = vmatpush1.msra.mxu0 %v81
    %608 = vmatprep.subr.mxu0 0.0
    %609 = vmatpush1.msra.mxu0 %v80
    %610 = vmatprep.subr.mxu0 0.0
    %611 = vmatpush1.msra.mxu0 %v79
    %612 = vmatprep.subr.mxu0 0.0
    %613 = vmatpush2.msra.mxu0 0.0
    %614 = vmatprep.subr.mxu0 0.0
    %615 = vmatpush2.msra.mxu0 0.0
    %616 = vmatprep.subr.mxu0 0.0
    %617 = vmatpush2.msra.mxu0 0.0
    %618 = vmatprep.subr.mxu0 0.0
    %619 = vmatpush2.msra.mxu0 0.0
    %620 = vmatprep.subr.mxu0 0.0
    %621 = vmatpush2.msra.mxu0 0.0
    %622 = vmatprep.subr.mxu0 0.0
    %623 = vmatpush2.msra.mxu0 0.0
    %624 = vmatprep.subr.mxu0 0.0
    %625 = vmatpush2.msra.mxu0 0.0
    %626 = vmatprep.subr.mxu0 0.0
    %627 = vmatpush2.msra.mxu0 0.0
    %628 = vmatprep.subr.mxu0 0.0
    %629 = vmatpush2.msra.mxu0 0.0
    %630 = vmatprep.subr.mxu0 0.0
    %631 = vmatpush2.msra.mxu0 0.0
    %632 = vmatprep.subr.mxu0 0.0
    %633 = vmatpush2.msra.mxu0 0.0
    %634 = vmatprep.subr.mxu0 0.0
    %635 = vmatpush2.msra.mxu0 0.0
    %636 = vmatprep.subr.mxu0 0.0
    %637 = vmatpush2.msra.mxu0 0.0
    %638 = vmatprep.subr.mxu0 0.0
    %639 = vmatpush2.msra.mxu0 0.0
    %640 = vmatprep.subr.mxu0 0.0
    %641 = vmatpush2.msra.mxu0 0.0
    %642 = vmatprep.subr.mxu0 0.0
    %643 = vmatpush2.msra.mxu0 0.0
    %644 = vmatprep.mubr.f32.mxu0 0.0
    %645 = vmatmul.mubr.f32.gmra.mxu0 %v509
    %v646 = vpop.f32.mrf.mxu0
    %v647 = vadd.f32 %v577, %v646
    %v648 = vpop.f32.mrf.mxu0
    %649 = vdwg.mxu0
    %650 = vst [vmem:[#allocation7] sm:$0xff] %v647
    // Predicated region
    $region18: #{forward.1} parent=1 // pred_check
      _
    $region19: #{forward.1} parent=1 // pred_check_branch
      %652 = sbr.rel (0) target = $region21
    $region20: #{forward.1} parent=1 // pred_region
      %s654 = ssub.s32 128, 128
      %655 = vsyncadd [#allocation4], %s654
      %s657 = sshll.u32 [#allocation7], 4
      %s658 = int_to_ptr.vmem [resolvable:$true] %s657
      %660 = dma.vmem_to_hbm [thread:$0]  %s658, 128, %s2, [#allocation4]
    $region21: #{forward.1} parent=1 // pred_fallthru
      _
    // Predicated region
    $region22: #{forward.1} parent=1 // pred_check
      _
    $region23: #{forward.1} parent=1 // pred_check_branch
      %662 = sbr.rel (0) target = $region25
    $region24: #{forward.1} parent=1 // pred_region
      %663 = dma.done [#allocation4], 128
    $region25: #{forward.1} parent=1 // pred_fallthru
      _
    %664 = vsyncpa [#allocation3], 1
    %665 = vsyncpa [#allocation6], 1
    %666 = vsyncpa [#allocation4], 1

</llo_original>
